<compile_context>
chip_gen: v7x
topology: tpu7x:2x2x1
jax: 0.10.0
libtpu: 0.0.40
codegen_flags: <defaults>
</compile_context>

<pallas_src>
import jax
import jax.numpy as jnp
from jax.experimental import pallas as pl
from jax.experimental.pallas import tpu as pltpu


def _round_up(x, m):
    return ((x + m - 1) // m) * m


def _wrapped_linear_kernel(x_ref, w_ref, b_ref, o_ref):
    # bf16 MXU operands (full-rate on v6e/v7x, valid on v5e), f32 accumulation.
    x = x_ref[...].astype(jnp.bfloat16)
    w = w_ref[...].astype(jnp.bfloat16)          # no-op: w is stored bf16
    acc = jnp.dot(x, w, preferred_element_type=jnp.float32)
    acc = acc + b_ref[...].astype(jnp.float32)   # bias add in f32 on the VPU
    o_ref[...] = acc.astype(o_ref.dtype)


def wrapped_model_forward(x, w, b, *, tm=None, tn=None,
                          vmem_budget_bytes=40 * 1024 * 1024):
    """WrappedModel(nn.Linear(K, N)).forward(x) as a Pallas TPU kernel.

    x: [B, K]  activations (f32 or bf16; output dtype follows x)
    w: [K, N]  weight (transposed vs PyTorch [N, K]); store bf16 at load time
    b: [1, N]  bias (bf16 or f32)
    returns: [B, N] in x.dtype
    """
    B, K = x.shape
    K2, N = w.shape
    assert K == K2 and b.shape == (1, N)
    out_dtype = x.dtype

    # ---- tile geometry ---------------------------------------------------
    # N tile: full width when it fits, else 512 lanes (multiple of 128 keeps
    # MXU passes and output stores lane-dense / unmasked).
    if tn is None:
        tn = N if N <= 512 else 512
    assert tn == N or tn % 128 == 0

    # Batch tile: as large as possible (mem-bound kernel), but keep >= ~8 grid
    # steps when B allows so the DMA double-buffer overlaps and both v7x TCs
    # get several iterations.  Floor of 512 rows; tiny B just uses one block.
    if tm is None:
        tm = min(2048, _round_up(B, 8))
        while tm > 512 and pl.cdiv(B, tm) < 8:
            tm //= 2

    gn = pl.cdiv(N, tn)
    w_bufs = 1 if gn == 1 else 2       # constant weight block -> single buffer

    def _vmem_estimate(tm_):
        return (2 * tm_ * K * x.dtype.itemsize                    # x (double buffer)
                + 2 * tm_ * tn * jnp.dtype(out_dtype).itemsize    # out (double buffer)
                + w_bufs * K * tn * w.dtype.itemsize              # weight block(s)
                + w_bufs * 1 * tn * b.dtype.itemsize)             # bias block(s)

    # Shrink tm if the footprint would exceed the per-generation VMEM budget
    # (v7x: 64 MiB physical / 32 MiB default scoped; v5e default scoped 16 MiB).
    while _vmem_estimate(tm) > vmem_budget_bytes and tm > 8:
        tm //= 2
    gm = pl.cdiv(B, tm)

    vmem_limit = int(min(max(_vmem_estimate(tm) * 3 // 2, 16 * 1024 * 1024),
                         48 * 1024 * 1024))

    # Constant (never re-DMA'd) weight / bias blocks: single-buffer them.
    const_kwargs = {"pipeline_mode": pl.Buffered(1)} if gn == 1 else {}

    grid = (gm, gn)    # i = batch tile (outer), j = feature tile (inner)
    return pl.pallas_call(
        _wrapped_linear_kernel,
        out_shape=jax.ShapeDtypeStruct((B, N), out_dtype),
        grid=grid,
        in_specs=[
            # x: batch-tiled, double-buffered HBM->VMEM stream, constant over j.
            pl.BlockSpec((tm, K), lambda i, j: (i, 0)),
            # weight: feature-tiled only; fully VMEM-resident when gn == 1.
            pl.BlockSpec((K, tn), lambda i, j: (0, j), **const_kwargs),
            # bias: same indexing as the weight (kept in VMEM, not SMEM).
            pl.BlockSpec((1, tn), lambda i, j: (0, j), **const_kwargs),
        ],
        out_specs=pl.BlockSpec((tm, tn), lambda i, j: (i, j)),
        compiler_params=pltpu.CompilerParams(
            # Pure data-parallel (K un-tiled, no reduction axis): both axes
            # shardable across v7x's two TensorCores; harmless on v5e/v6e.
            dimension_semantics=("parallel", "parallel"),
            vmem_limit_bytes=vmem_limit,
        ),
    )(x, w, b)


if __name__ == "__main__":
    key = jax.random.PRNGKey(0)
    kx, kw, kb = jax.random.split(key, 3)

    # Small, tile-able demo shapes: auto-tiling picks tm=512 -> grid (4, 1),
    # exercising the streamed-batch / VMEM-resident-weight path.
    batch, in_features, out_features = 2048, 128, 128

    x = jax.random.normal(kx, (batch, in_features), dtype=jnp.float32)
    # PyTorch-style uniform fan-in init; parameters stored bf16 in HBM
    # (one-time cast at model-load time, not inside the hot path).
    bound = 1.0 / (in_features ** 0.5)
    w = jax.random.uniform(kw, (in_features, out_features), dtype=jnp.float32,
                           minval=-bound, maxval=bound).astype(jnp.bfloat16)
    b = jax.random.uniform(kb, (1, out_features), dtype=jnp.float32,
                           minval=-bound, maxval=bound).astype(jnp.bfloat16)

    out = jax.block_until_ready(wrapped_model_forward(x, w, b))

    # Reference with identical numerics (bf16 MXU operands, f32 accumulation).
    ref = (jnp.dot(x.astype(jnp.bfloat16), w, preferred_element_type=jnp.float32)
           + b.astype(jnp.float32)).astype(x.dtype)
    assert out.shape == (batch, out_features)
    assert jnp.allclose(out, ref, atol=1e-2, rtol=1e-2)

    print("KERNEL_OK")
</pallas_src>

<mosaic_0001>
module attributes {stable_mosaic.version = 11 : i64} {
  func.func @_wrapped_linear_kernel(%arg0: i32, %arg1: i32, %arg2: memref<512x128xf32, #tpu.memory_space<vmem>>, %arg3: memref<128x128xbf16, #tpu.memory_space<vmem>>, %arg4: memref<1x128xbf16, #tpu.memory_space<vmem>>, %arg5: memref<512x128xf32, #tpu.memory_space<vmem>>) attributes {dimension_semantics = [#tpu.dimension_semantics<parallel>, #tpu.dimension_semantics<parallel>], iteration_bounds = array<i64: 4, 1>, scalar_prefetch = 0 : i64, scratch_operands = 0 : i64, tpu.core_type = #tpu.core_type<tc>, window_params = [{transform_indices = @transform_0, window_bounds = array<i64: 512, 128>}, {pipeline_mode = #tpu.pipeline_mode<synchronous>, transform_indices = @transform_1, window_bounds = array<i64: 128, 128>}, {pipeline_mode = #tpu.pipeline_mode<synchronous>, transform_indices = @transform_2, window_bounds = array<i64: 1, 128>}, {transform_indices = @transform_3, window_bounds = array<i64: 512, 128>}]} {
    %c0 = arith.constant 0 : index
    %c0_0 = arith.constant 0 : index
    %0 = vector.load %arg2[%c0, %c0_0] : memref<512x128xf32, #tpu.memory_space<vmem>>, vector<512x128xf32>
    %1 = arith.truncf %0 : vector<512x128xf32> to vector<512x128xbf16>
    %c0_1 = arith.constant 0 : index
    %c0_2 = arith.constant 0 : index
    %2 = vector.load %arg3[%c0_1, %c0_2] : memref<128x128xbf16, #tpu.memory_space<vmem>>, vector<128x128xbf16>
    %cst = arith.constant dense<0.000000e+00> : vector<512x128xf32>
    %3 = tpu.matmul %1, %2, %cst {dimension_numbers = #tpu.dot_dimension_numbers<[1], [0], [0], [1], [0, 0, 1, 1], [], []>} : vector<512x128xbf16>, vector<128x128xbf16>, vector<512x128xf32> -> vector<512x128xf32>
    %c0_3 = arith.constant 0 : index
    %c0_4 = arith.constant 0 : index
    %4 = vector.load %arg4[%c0_3, %c0_4] : memref<1x128xbf16, #tpu.memory_space<vmem>>, vector<1x128xbf16>
    %5 = arith.extf %4 : vector<1x128xbf16> to vector<1x128xf32>
    %6 = vector.broadcast %5 : vector<1x128xf32> to vector<512x128xf32>
    %7 = arith.addf %3, %6 : vector<512x128xf32>
    %c0_5 = arith.constant 0 : index
    %c0_6 = arith.constant 0 : index
    %8 = vector.load %arg5[%c0_5, %c0_6] : memref<512x128xf32, #tpu.memory_space<vmem>>, vector<512x128xf32>
    tpu.vector_store %arg5[%c0_5, %c0_6], %7 {strides = array<i32>} : memref<512x128xf32, #tpu.memory_space<vmem>>, vector<512x128xf32>,
    return
  }
  func.func @transform_0(%arg0: i32, %arg1: i32) -> (i32, i32) {
    %c0_i32 = arith.constant 0 : i32
    %c0_i32_0 = arith.constant 0 : i32
    return %arg0, %c0_i32 : i32, i32
  }
  func.func @transform_1(%arg0: i32, %arg1: i32) -> (i32, i32) {
    %c0_i32 = arith.constant 0 : i32
    %c0_i32_0 = arith.constant 0 : i32
    return %c0_i32, %arg1 : i32, i32
  }
  func.func @transform_2(%arg0: i32, %arg1: i32) -> (i32, i32) {
    %c0_i32 = arith.constant 0 : i32
    %c0_i32_0 = arith.constant 0 : i32
    return %c0_i32, %arg1 : i32, i32
  }
  func.func @transform_3(%arg0: i32, %arg1: i32) -> (i32, i32) {
    %c0_i32 = arith.constant 0 : i32
    return %arg0, %arg1 : i32, i32
  }
}

</mosaic_0001>

<llo_original>
// kernel: tpu_custom_call.1
$region0: #{tpu_custom_call.1}
  #allocation0 [shape = 'u32[]', space=smem, size = 0x4, offset = 0x4, fixed_abs, tag = 'smem constant byte address 0x4 - core index']
  #allocation1 [shape = 'u32[144,128]{1,0:T(1,128)}', space=vmem, size = 0x12000, scoped, tag = 'internal scratch']
  %s0 = inlined_call_operand.hbm [shape: f32[2048,128], index: 0, kind: input, shape index: {}]
  %s1 = inlined_call_operand.hbm [shape: bf16[128,128], index: 1, kind: input, shape index: {}]
  %s2 = inlined_call_operand.vmem [shape: bf16[1,128], index: 2, kind: input, shape index: {}]
  %s3 = inlined_call_operand.hbm [shape: f32[2048,128], index: 3, kind: output, shape index: {}]
  %s4 = sld [smem:[#allocation0]]
  $region53: #{tpu_custom_call.1} parent=0
    _
  %s6 = ssub.s32 1, %s4
  %s7 = scalar_select 0, %s6, %s4
  $region1: #{tpu_custom_call.1} parent=0
    #allocation2 [shape = 'u8[524288]{0}', space=vmem, size = 0x80000, scoped, tag = 'input window, operand 0']
    #allocation3 [shape = 's32[2]{0}', space=sflag, size = 0x8, scoped, tag = 'scoped memory for tpu_custom_call.1']
    #allocation4 [shape = 's32[2]{0}', space=sflag, size = 0x8, scoped, tag = 'scoped memory for tpu_custom_call.1']
    #allocation5 [shape = 'u8[32768]{0}', space=vmem, size = 0x8000, scoped, tag = 'input window, operand 1, single buffered']
    #allocation6 [shape = 's32[1]{0}', space=sflag, size = 0x4, scoped, tag = 'scoped memory for tpu_custom_call.1']
    #allocation7 [shape = 'u8[524288]{0}', space=vmem, size = 0x80000, scoped, tag = 'output window, operand 0']
    %8 = vsyncpa [#allocation3], 0
    %s9 = scalar_lea.sflag [#allocation3], 1
    %10 = vsyncpa %s9, 0
    %11 = vsyncpa [#allocation6], 0
    %12 = vsyncpa [#allocation4], 0
    %s13 = scalar_lea.sflag [#allocation4], 1
    %14 = vsyncpa %s13, 0
    loop: start=0, step=1, limit=6
    $region2: #{tpu_custom_call.1} parent=1 // loop_pre_header
      _
    $region3: #{tpu_custom_call.1} parent=1 // loop_header
      %s16 = sphi 0, %s20
      %p17 = scmp.ge.s32.totalorder %s16, 6
      %s23 = sphi 0, %s35
      %s24 = sphi 0, %s31
      %s25 = sphi 0, %s23
      %s26 = sphi 0, %s24
      %s27 = sphi 0, %s25
      %s28 = sphi 0, %s26
      %s38 = sphi 0, %s40
      %s41 = sphi 0, %s38
      %s42 = sphi 0, %s41
      %s58 = sphi 0, %s42
      %s64 = sphi 0, %s66
      %s67 = sphi 0, %s64
      %s68 = sphi 0, %s67
      %s84 = sphi 0, %s68
      %s90 = sphi 0, %s92
      %s93 = sphi 0, %s90
      %s94 = sphi 0, %s93
      %s110 = sphi 0, %s94
      %s118 = sphi 0, %s120
      %s121 = sphi 0, %s118
      %s122 = sphi 0, %s121
      %s138 = sphi 0, %s122
    $region4: #{tpu_custom_call.1} parent=1 // loop_header_branch
      %19 = sbr.rel (%p17) target = $region8
    $region5: #{tpu_custom_call.1} parent=1 // loop_body
      %s21 = ssub.s32 %s16, 1
      %s22 = ssub.s32 %s16, 2
      %s29 = sadd.s32 1, %s24
      %p30 = scmp.ge.s32.totalorder %s29, 1
      %s31 = scalar_select %p30, 0, %s29
      %s32 = sadd.s32 1, %s23
      %s33 = scalar_select %p30, %s32, %s23
      %p34 = scmp.ge.s32.totalorder %s33, 4
      %s35 = scalar_select %p34, 0, %s33
      %s36 = ssub.s32 %s23, %s35
      %p37 = scmp.eq.s32.totalorder %s36, 0
      %s39 = sadd.s32 %s38, 1
      %s40 = scalar_select %p37, %s38, %s39
      %p43 = pneg %p37
      %p44 = scmp.eq.s32.totalorder %s16, 3
      %p45 = por %p43, %p44
      %p46 = scmp.ne.s32.totalorder %s38, %s41
      %p47 = scmp.eq.s32.totalorder %s16, 0
      %p48 = por %p46, %p47
      %p49 = scmp.ne.s32.totalorder %s38, %s41
      %p50 = scmp.eq.s32.totalorder %s21, 3
      %p51 = por %p49, %p50
      %p52 = scmp.ne.s32.totalorder %s41, %s42
      %p53 = scmp.eq.s32.totalorder %s21, 0
      %p54 = por %p52, %p53
      %p55 = scmp.ne.s32.totalorder %s41, %s42
      %p56 = scmp.eq.s32.totalorder %s22, 3
      %p57 = por %p55, %p56
      %p59 = scmp.ne.s32.totalorder %s42, %s58
      %p60 = scmp.eq.s32.totalorder %s22, 0
      %p61 = por %p59, %p60
      %s62 = ssub.s32 %s24, %s31
      %p63 = scmp.eq.s32.totalorder %s62, 0
      %s65 = sadd.s32 %s64, 1
      %s66 = scalar_select %p63, %s64, %s65
      %p69 = pneg %p63
      %p70 = scmp.eq.s32.totalorder %s16, 3
      %p71 = por %p69, %p70
      %p72 = scmp.ne.s32.totalorder %s64, %s67
      %p73 = scmp.eq.s32.totalorder %s16, 0
      %p74 = por %p72, %p73
      %p75 = scmp.ne.s32.totalorder %s64, %s67
      %p76 = scmp.eq.s32.totalorder %s21, 3
      %p77 = por %p75, %p76
      %p78 = scmp.ne.s32.totalorder %s67, %s68
      %p79 = scmp.eq.s32.totalorder %s21, 0
      %p80 = por %p78, %p79
      %p81 = scmp.ne.s32.totalorder %s67, %s68
      %p82 = scmp.eq.s32.totalorder %s22, 3
      %p83 = por %p81, %p82
      %p85 = scmp.ne.s32.totalorder %s68, %s84
      %p86 = scmp.eq.s32.totalorder %s22, 0
      %p87 = por %p85, %p86
      %s88 = ssub.s32 %s24, %s31
      %p89 = scmp.eq.s32.totalorder %s88, 0
      %s91 = sadd.s32 %s90, 1
      %s92 = scalar_select %p89, %s90, %s91
      %p95 = pneg %p89
      %p96 = scmp.eq.s32.totalorder %s16, 3
      %p97 = por %p95, %p96
      %p98 = scmp.ne.s32.totalorder %s90, %s93
      %p99 = scmp.eq.s32.totalorder %s16, 0
      %p100 = por %p98, %p99
      %p101 = scmp.ne.s32.totalorder %s90, %s93
      %p102 = scmp.eq.s32.totalorder %s21, 3
      %p103 = por %p101, %p102
      %p104 = scmp.ne.s32.totalorder %s93, %s94
      %p105 = scmp.eq.s32.totalorder %s21, 0
      %p106 = por %p104, %p105
      %p107 = scmp.ne.s32.totalorder %s93, %s94
      %p108 = scmp.eq.s32.totalorder %s22, 3
      %p109 = por %p107, %p108
      %p111 = scmp.ne.s32.totalorder %s94, %s110
      %p112 = scmp.eq.s32.totalorder %s22, 0
      %p113 = por %p111, %p112
      %s114 = ssub.s32 %s23, %s35
      %s115 = ssub.s32 %s24, %s31
      %s116 = sor.u32 %s114, %s115
      %p117 = scmp.eq.s32.totalorder %s116, 0
      %s119 = sadd.s32 %s118, 1
      %s120 = scalar_select %p117, %s118, %s119
      %p123 = pneg %p117
      %p124 = scmp.eq.s32.totalorder %s16, 3
      %p125 = por %p123, %p124
      %p126 = scmp.ne.s32.totalorder %s118, %s121
      %p127 = scmp.eq.s32.totalorder %s16, 0
      %p128 = por %p126, %p127
      %p129 = scmp.ne.s32.totalorder %s118, %s121
      %p130 = scmp.eq.s32.totalorder %s21, 3
      %p131 = por %p129, %p130
      %p132 = scmp.ne.s32.totalorder %s121, %s122
      %p133 = scmp.eq.s32.totalorder %s21, 0
      %p134 = por %p132, %p133
      %p135 = scmp.ne.s32.totalorder %s121, %s122
      %p136 = scmp.eq.s32.totalorder %s22, 3
      %p137 = por %p135, %p136
      %p139 = scmp.ne.s32.totalorder %s122, %s138
      %p140 = scmp.eq.s32.totalorder %s22, 0
      %p141 = por %p139, %p140
      %p142 = scmp.le.s32.totalorder 1, %s16
      %p143 = scmp.lt.s32.totalorder %s16, 5
      %p144 = pnand %p142, %p143
      %p145 = pneg %p144
      // Predicated region
      $region9: #{tpu_custom_call.1} parent=5 // pred_check
        _
      $region10: #{tpu_custom_call.1} parent=5 // pred_check_branch
        %147 = sbr.rel (%p144) target = $region12
      $region11: #{tpu_custom_call.1} parent=5 // pred_region
        %s148 = ssub.s32 %s16, 1
        // Predicated region
        $region13: #{tpu_custom_call.1} parent=11 // pred_check
          %p149 = pneg %p80
        $region14: #{tpu_custom_call.1} parent=11 // pred_check_branch
          %151 = sbr.rel (%p149) target = $region16
        $region15: #{tpu_custom_call.1} parent=11 // pred_region
          %s153 = ssub.s32 1024, 1024
          %154 = vsyncadd [#allocation6], %s153
          %s155 = smul.addr %s26, 64
          %s156 = scalar_lea.hbm %s1, %s155
          %s157 = sshll.u32 [#allocation5], 4
          %s158 = int_to_ptr.vmem [resolvable:$true] %s157
          %163 = dma.hbm_to_vmem [thread:$0]  %s156, 1024, %s158, [#allocation6], 64, 64, 4
        $region16: #{tpu_custom_call.1} parent=11 // pred_fallthru
          _
        // Predicated region
        $region17: #{tpu_custom_call.1} parent=11 // pred_check
          %p164 = pneg %p106
        $region18: #{tpu_custom_call.1} parent=11 // pred_check_branch
          %166 = sbr.rel (%p164) target = $region20
        $region19: #{tpu_custom_call.1} parent=11 // pred_region
          %p167 = scmp.lt.s32.totalorder %s26, 0
          %s168 = scalar_select %p167, %s26, 0
          %s169 = scalar_lea.vmem %s2, %s168
        $region20: #{tpu_custom_call.1} parent=11 // pred_fallthru
          _
      $region12: #{tpu_custom_call.1} parent=5 // pred_fallthru
        _
      %p170 = scmp.lt.s32.totalorder %s16, 4
      // Predicated region
      $region21: #{tpu_custom_call.1} parent=5 // pred_check
        %p171 = pneg %p170
      $region22: #{tpu_custom_call.1} parent=5 // pred_check_branch
        %173 = sbr.rel (%p171) target = $region24
      $region23: #{tpu_custom_call.1} parent=5 // pred_region
        // Predicated region
        $region25: #{tpu_custom_call.1} parent=23 // pred_check
          %p174 = pneg %p48
        $region26: #{tpu_custom_call.1} parent=23 // pred_check_branch
          %176 = sbr.rel (%p174) target = $region28
        $region27: #{tpu_custom_call.1} parent=23 // pred_region
          %s177 = sand.u32 %s38, 1
          %s178 = scalar_lea.sflag [#allocation3], %s177
          %s179 = sand.u32 %s38, 1
          %s180 = smul.addr %s179, 512
          %s181 = scalar_lea.vmem [#allocation2], %s180
          %s182 = smul.u32 64, %s23
          %s184 = ssub.s32 8192, 8192
          %185 = vsyncadd %s178, %s184
          %s186 = smul.addr %s182, 128
          %s187 = scalar_lea.hbm %s0, %s186
          %s188 = sshll.u32 %s181, 4
          %s189 = int_to_ptr.vmem [resolvable:$true] %s188
          %194 = dma.hbm_to_vmem [thread:$0]  %s187, 8192, %s189, %s178, 128, 128, 8
        $region28: #{tpu_custom_call.1} parent=23 // pred_fallthru
          _
      $region24: #{tpu_custom_call.1} parent=5 // pred_fallthru
        _
      %p195 = scmp.le.s32.totalorder 1, %s16
      %p196 = scmp.lt.s32.totalorder %s16, 5
      %p197 = pnand %p195, %p196
      %p198 = pneg %p197
      // Predicated region
      $region29: #{tpu_custom_call.1} parent=5 // pred_check
        _
      $region30: #{tpu_custom_call.1} parent=5 // pred_check_branch
        %200 = sbr.rel (%p197) target = $region32
      $region31: #{tpu_custom_call.1} parent=5 // pred_region
        %s201 = ssub.s32 %s16, 1
        %s202 = sand.u32 %s41, 1
        %s203 = scalar_lea.sflag [#allocation3], %s202
        %s204 = sand.u32 %s41, 1
        %s205 = smul.addr %s204, 512
        %s206 = scalar_lea.vmem [#allocation2], %s205
        // Predicated region
        $region33: #{tpu_custom_call.1} parent=31 // pred_check
          %p207 = pneg %p54
        $region34: #{tpu_custom_call.1} parent=31 // pred_check_branch
          %209 = sbr.rel (%p207) target = $region36
        $region35: #{tpu_custom_call.1} parent=31 // pred_region
          %210 = dma.done %s203, 8192
        $region36: #{tpu_custom_call.1} parent=31 // pred_fallthru
          _
        // Predicated region
        $region37: #{tpu_custom_call.1} parent=31 // pred_check
          %p211 = pneg %p80
        $region38: #{tpu_custom_call.1} parent=31 // pred_check_branch
          %213 = sbr.rel (%p211) target = $region40
        $region39: #{tpu_custom_call.1} parent=31 // pred_region
          %214 = dma.done [#allocation6], 1024
        $region40: #{tpu_custom_call.1} parent=31 // pred_fallthru
          _
        %s215 = sand.u32 %s41, 1
        %s216 = scalar_lea.sflag [#allocation3], %s215
        %s217 = sand.u32 %s41, 1
        %s218 = smul.addr %s217, 512
        %s219 = scalar_lea.vmem [#allocation2], %s218
        %p220 = pneg %p54
        %p221 = pneg %p51
        %p222 = pneg %p80
        %p223 = pneg %p77
        %p224 = scmp.lt.s32.totalorder %s26, 0
        %s225 = scalar_select %p224, %s26, 0
        %s226 = scalar_lea.vmem %s2, %s225
        %p227 = pneg %p106
        %p228 = pneg %p103
        %p229 = pneg %p134
        %p230 = pneg %p131
        %s231 = sand.u32 %s121, 1
        %s232 = scalar_lea.sflag [#allocation4], %s231
        %s233 = sand.u32 %s121, 1
        %s234 = smul.addr %s233, 512
        %s235 = scalar_lea.vmem [#allocation7], %s234
        %s236 = smul.u32 64, %s25
        %p237 = scmp.lt.s32.totalorder %s26, 0
        %s238 = scalar_select %p237, %s26, 0
        %s239 = scalar_lea.vmem %s2, %s238
        %s240 = smul.u32 64, %s25
        %v242 = vld [vmem:[%s206] sm:$0xff]
        %v243 = vld [vmem:[%s206 + $0x8] sm:$0xff]
        %v244 = vld [vmem:[%s206 + $0x10] sm:$0xff]
        %v245 = vld [vmem:[%s206 + $0x18] sm:$0xff]
        %v246 = vld [vmem:[%s206 + $0x20] sm:$0xff]
        %v247 = vld [vmem:[%s206 + $0x28] sm:$0xff]
        %v248 = vld [vmem:[%s206 + $0x30] sm:$0xff]
        %v249 = vld [vmem:[%s206 + $0x38] sm:$0xff]
        %v250 = vld [vmem:[%s206 + $0x40] sm:$0xff]
        %v251 = vld [vmem:[%s206 + $0x48] sm:$0xff]
        %v252 = vld [vmem:[%s206 + $0x50] sm:$0xff]
        %v253 = vld [vmem:[%s206 + $0x58] sm:$0xff]
        %v254 = vld [vmem:[%s206 + $0x60] sm:$0xff]
        %v255 = vld [vmem:[%s206 + $0x68] sm:$0xff]
        %v256 = vld [vmem:[%s206 + $0x70] sm:$0xff]
        %v257 = vld [vmem:[%s206 + $0x78] sm:$0xff]
        %v258 = vld [vmem:[%s206 + $0x80] sm:$0xff]
        %v259 = vld [vmem:[%s206 + $0x88] sm:$0xff]
        %v260 = vld [vmem:[%s206 + $0x90] sm:$0xff]
        %v261 = vld [vmem:[%s206 + $0x98] sm:$0xff]
        %v262 = vld [vmem:[%s206 + $0xa0] sm:$0xff]
        %v263 = vld [vmem:[%s206 + $0xa8] sm:$0xff]
        %v264 = vld [vmem:[%s206 + $0xb0] sm:$0xff]
        %v265 = vld [vmem:[%s206 + $0xb8] sm:$0xff]
        %v266 = vld [vmem:[%s206 + $0xc0] sm:$0xff]
        %v267 = vld [vmem:[%s206 + $0xc8] sm:$0xff]
        %v268 = vld [vmem:[%s206 + $0xd0] sm:$0xff]
        %v269 = vld [vmem:[%s206 + $0xd8] sm:$0xff]
        %v270 = vld [vmem:[%s206 + $0xe0] sm:$0xff]
        %v271 = vld [vmem:[%s206 + $0xe8] sm:$0xff]
        %v272 = vld [vmem:[%s206 + $0xf0] sm:$0xff]
        %v273 = vld [vmem:[%s206 + $0xf8] sm:$0xff]
        %v274 = vld [vmem:[%s206 + $0x100] sm:$0xff]
        %v275 = vld [vmem:[%s206 + $0x108] sm:$0xff]
        %v276 = vld [vmem:[%s206 + $0x110] sm:$0xff]
        %v277 = vld [vmem:[%s206 + $0x118] sm:$0xff]
        %v278 = vld [vmem:[%s206 + $0x120] sm:$0xff]
        %v279 = vld [vmem:[%s206 + $0x128] sm:$0xff]
        %v280 = vld [vmem:[%s206 + $0x130] sm:$0xff]
        %v281 = vld [vmem:[%s206 + $0x138] sm:$0xff]
        %v282 = vld [vmem:[%s206 + $0x140] sm:$0xff]
        %v283 = vld [vmem:[%s206 + $0x148] sm:$0xff]
        %v284 = vld [vmem:[%s206 + $0x150] sm:$0xff]
        %v285 = vld [vmem:[%s206 + $0x158] sm:$0xff]
        %v286 = vld [vmem:[%s206 + $0x160] sm:$0xff]
        %v287 = vld [vmem:[%s206 + $0x168] sm:$0xff]
        %v288 = vld [vmem:[%s206 + $0x170] sm:$0xff]
        %v289 = vld [vmem:[%s206 + $0x178] sm:$0xff]
        %v290 = vld [vmem:[%s206 + $0x180] sm:$0xff]
        %v291 = vld [vmem:[%s206 + $0x188] sm:$0xff]
        %v292 = vld [vmem:[%s206 + $0x190] sm:$0xff]
        %v293 = vld [vmem:[%s206 + $0x198] sm:$0xff]
        %v294 = vld [vmem:[%s206 + $0x1a0] sm:$0xff]
        %v295 = vld [vmem:[%s206 + $0x1a8] sm:$0xff]
        %v296 = vld [vmem:[%s206 + $0x1b0] sm:$0xff]
        %v297 = vld [vmem:[%s206 + $0x1b8] sm:$0xff]
        %v298 = vld [vmem:[%s206 + $0x1c0] sm:$0xff]
        %v299 = vld [vmem:[%s206 + $0x1c8] sm:$0xff]
        %v300 = vld [vmem:[%s206 + $0x1d0] sm:$0xff]
        %v301 = vld [vmem:[%s206 + $0x1d8] sm:$0xff]
        %v302 = vld [vmem:[%s206 + $0x1e0] sm:$0xff]
        %v303 = vld [vmem:[%s206 + $0x1e8] sm:$0xff]
        %v304 = vld [vmem:[%s206 + $0x1f0] sm:$0xff]
        %v305 = vld [vmem:[%s206 + $0x1f8] sm:$0xff]
        %v306 = vpack.c.bf16 %v243, %v242
        %v307 = vpack.c.bf16 %v245, %v244
        %v308 = vpack.c.bf16 %v247, %v246
        %v309 = vpack.c.bf16 %v249, %v248
        %v310 = vpack.c.bf16 %v251, %v250
        %v311 = vpack.c.bf16 %v253, %v252
        %v312 = vpack.c.bf16 %v255, %v254
        %v313 = vpack.c.bf16 %v257, %v256
        %v314 = vpack.c.bf16 %v259, %v258
        %v315 = vpack.c.bf16 %v261, %v260
        %v316 = vpack.c.bf16 %v263, %v262
        %v317 = vpack.c.bf16 %v265, %v264
        %v318 = vpack.c.bf16 %v267, %v266
        %v319 = vpack.c.bf16 %v269, %v268
        %v320 = vpack.c.bf16 %v271, %v270
        %v321 = vpack.c.bf16 %v273, %v272
        %v322 = vpack.c.bf16 %v275, %v274
        %v323 = vpack.c.bf16 %v277, %v276
        %v324 = vpack.c.bf16 %v279, %v278
        %v325 = vpack.c.bf16 %v281, %v280
        %v326 = vpack.c.bf16 %v283, %v282
        %v327 = vpack.c.bf16 %v285, %v284
        %v328 = vpack.c.bf16 %v287, %v286
        %v329 = vpack.c.bf16 %v289, %v288
        %v330 = vpack.c.bf16 %v291, %v290
        %v331 = vpack.c.bf16 %v293, %v292
        %v332 = vpack.c.bf16 %v295, %v294
        %v333 = vpack.c.bf16 %v297, %v296
        %v334 = vpack.c.bf16 %v299, %v298
        %v335 = vpack.c.bf16 %v301, %v300
        %v336 = vpack.c.bf16 %v303, %v302
        %v337 = vpack.c.bf16 %v305, %v304
        %v338 = vld [vmem:[#allocation5] sm:$0xf]
        %v339 = vld [vmem:[#allocation5 + $0x4] sm:$0xf]
        %v340 = vld [vmem:[#allocation5 + $0x8] sm:$0xf]
        %v341 = vld [vmem:[#allocation5 + $0xc] sm:$0xf]
        %v342 = vld [vmem:[#allocation5 + $0x10] sm:$0xf]
        %v343 = vld [vmem:[#allocation5 + $0x14] sm:$0xf]
        %v344 = vld [vmem:[#allocation5 + $0x18] sm:$0xf]
        %v345 = vld [vmem:[#allocation5 + $0x1c] sm:$0xf]
        %v346 = vld [vmem:[#allocation5 + $0x20] sm:$0xf]
        %v347 = vld [vmem:[#allocation5 + $0x24] sm:$0xf]
        %v348 = vld [vmem:[#allocation5 + $0x28] sm:$0xf]
        %v349 = vld [vmem:[#allocation5 + $0x2c] sm:$0xf]
        %v350 = vld [vmem:[#allocation5 + $0x30] sm:$0xf]
        %v351 = vld [vmem:[#allocation5 + $0x34] sm:$0xf]
        %v352 = vld [vmem:[#allocation5 + $0x38] sm:$0xf]
        %v353 = vld [vmem:[#allocation5 + $0x3c] sm:$0xf]
        %v354 = vld [vmem:[%s239] sm:$0x1]
        %v355 = vunpack.c.l.bf16 %v354
        %v356 = vlaneseq
        %v357 = vshrl.u32 %v356, 7
        %v358 = vsub.s32 0, %v357
        %v359 = vrot.slane %v355, %v358
        %v376 = vunpack.c.l.b16 %v338
        %v377 = vunpack.c.l.b16 %v339
        %v378 = vunpack.c.l.b16 %v340
        %v379 = vunpack.c.l.b16 %v341
        %v380 = vunpack.c.l.b16 %v342
        %v381 = vunpack.c.l.b16 %v343
        %v382 = vunpack.c.l.b16 %v344
        %v383 = vunpack.c.l.b16 %v345
        %v384 = vunpack.c.l.b16 %v346
        %v385 = vunpack.c.l.b16 %v347
        %v386 = vunpack.c.l.b16 %v348
        %v387 = vunpack.c.l.b16 %v349
        %v388 = vunpack.c.l.b16 %v350
        %v389 = vunpack.c.l.b16 %v351
        %v390 = vunpack.c.l.b16 %v352
        %v391 = vunpack.c.l.b16 %v353
        %v392 = vpack.c.b16 %v377, %v376
        %v393 = vpack.c.b16 %v379, %v378
        %v394 = vpack.c.b16 %v381, %v380
        %v395 = vpack.c.b16 %v383, %v382
        %v396 = vpack.c.b16 %v385, %v384
        %v397 = vpack.c.b16 %v387, %v386
        %v398 = vpack.c.b16 %v389, %v388
        %v399 = vpack.c.b16 %v391, %v390
        %408 = vmatprep.subr.bf16.mxu0 0
        %409 = vmatpush1.bf16.msra.mxu0 %v392
        %410 = vmatprep.subr.bf16.mxu0 0
        %411 = vmatpush1.bf16.msra.mxu0 %v393
        %412 = vmatprep.subr.bf16.mxu0 0
        %413 = vmatpush1.bf16.msra.mxu0 %v394
        %414 = vmatprep.subr.bf16.mxu0 0
        %415 = vmatpush1.bf16.msra.mxu0 %v395
        %416 = vmatprep.subr.bf16.mxu0 0
        %417 = vmatpush1.bf16.msra.mxu0 %v396
        %418 = vmatprep.subr.bf16.mxu0 0
        %419 = vmatpush1.bf16.msra.mxu0 %v397
        %420 = vmatprep.subr.bf16.mxu0 0
        %421 = vmatpush1.bf16.msra.mxu0 %v398
        %422 = vmatprep.subr.bf16.mxu0 0
        %423 = vmatpush1.bf16.msra.mxu0 %v399
        %424 = vmatprep.subr.bf16.mxu0 0
        %425 = vmatpush1.bf16.msra.mxu0 0
        %426 = vmatprep.subr.bf16.mxu0 0
        %427 = vmatpush1.bf16.msra.mxu0 0
        %428 = vmatprep.subr.bf16.mxu0 0
        %429 = vmatpush1.bf16.msra.mxu0 0
        %430 = vmatprep.subr.bf16.mxu0 0
        %431 = vmatpush1.bf16.msra.mxu0 0
        %432 = vmatprep.subr.bf16.mxu0 0
        %433 = vmatpush1.bf16.msra.mxu0 0
        %434 = vmatprep.subr.bf16.mxu0 0
        %435 = vmatpush1.bf16.msra.mxu0 0
        %436 = vmatprep.subr.bf16.mxu0 0
        %437 = vmatpush1.bf16.msra.mxu0 0
        %438 = vmatprep.subr.bf16.mxu0 0
        %439 = vmatpush1.bf16.msra.mxu0 0
        %440 = vmatprep.mubr.bf16.mxu0 0
        %441 = vmatmul.mubr.bf16.gmra.mrb[0].mxu0 %v306
        %v442 = vpop.f32.mrb[0].mxu0
        %v443 = vadd.f32 %v359, %v442
        %v444 = vpop.f32.mrb[0].mxu0
        %v445 = vpop.f32.mrb[0].mxu0
        %v446 = vadd.f32 %v359, %v445
        %v447 = vpop.f32.mrb[0].mxu0
        %448 = vmatprep.mubr.bf16.mxu0 0
        %449 = vmatmul.mubr.bf16.gmra.mrb[0].mxu0 %v307
        %v450 = vpop.f32.mrb[0].mxu0
        %v451 = vadd.f32 %v359, %v450
        %v452 = vpop.f32.mrb[0].mxu0
        %v453 = vpop.f32.mrb[0].mxu0
        %v454 = vadd.f32 %v359, %v453
        %v455 = vpop.f32.mrb[0].mxu0
        %456 = vmatprep.mubr.bf16.mxu0 0
        %457 = vmatmul.mubr.bf16.gmra.mrb[0].mxu0 %v308
        %v458 = vpop.f32.mrb[0].mxu0
        %v459 = vadd.f32 %v359, %v458
        %v460 = vpop.f32.mrb[0].mxu0
        %v461 = vpop.f32.mrb[0].mxu0
        %v462 = vadd.f32 %v359, %v461
        %v463 = vpop.f32.mrb[0].mxu0
        %464 = vmatprep.mubr.bf16.mxu0 0
        %465 = vmatmul.mubr.bf16.gmra.mrb[0].mxu0 %v309
        %v466 = vpop.f32.mrb[0].mxu0
        %v467 = vadd.f32 %v359, %v466
        %v468 = vpop.f32.mrb[0].mxu0
        %v469 = vpop.f32.mrb[0].mxu0
        %v470 = vadd.f32 %v359, %v469
        %v471 = vpop.f32.mrb[0].mxu0
        %472 = vmatprep.mubr.bf16.mxu0 0
        %473 = vmatmul.mubr.bf16.gmra.mrb[0].mxu0 %v310
        %v474 = vpop.f32.mrb[0].mxu0
        %v475 = vadd.f32 %v359, %v474
        %v476 = vpop.f32.mrb[0].mxu0
        %v477 = vpop.f32.mrb[0].mxu0
        %v478 = vadd.f32 %v359, %v477
        %v479 = vpop.f32.mrb[0].mxu0
        %480 = vmatprep.mubr.bf16.mxu0 0
        %481 = vmatmul.mubr.bf16.gmra.mrb[0].mxu0 %v311
        %v482 = vpop.f32.mrb[0].mxu0
        %v483 = vadd.f32 %v359, %v482
        %v484 = vpop.f32.mrb[0].mxu0
        %v485 = vpop.f32.mrb[0].mxu0
        %v486 = vadd.f32 %v359, %v485
        %v487 = vpop.f32.mrb[0].mxu0
        %488 = vmatprep.mubr.bf16.mxu0 0
        %489 = vmatmul.mubr.bf16.gmra.mrb[0].mxu0 %v312
        %v490 = vpop.f32.mrb[0].mxu0
        %v491 = vadd.f32 %v359, %v490
        %v492 = vpop.f32.mrb[0].mxu0
        %v493 = vpop.f32.mrb[0].mxu0
        %v494 = vadd.f32 %v359, %v493
        %v495 = vpop.f32.mrb[0].mxu0
        %496 = vmatprep.mubr.bf16.mxu0 0
        %497 = vmatmul.mubr.bf16.gmra.mrb[0].mxu0 %v313
        %v498 = vpop.f32.mrb[0].mxu0
        %v499 = vadd.f32 %v359, %v498
        %v500 = vpop.f32.mrb[0].mxu0
        %v501 = vpop.f32.mrb[0].mxu0
        %v502 = vadd.f32 %v359, %v501
        %v503 = vpop.f32.mrb[0].mxu0
        %504 = vmatprep.mubr.bf16.mxu0 0
        %505 = vmatmul.mubr.bf16.gmra.mrb[0].mxu0 %v314
        %v506 = vpop.f32.mrb[0].mxu0
        %v507 = vadd.f32 %v359, %v506
        %v508 = vpop.f32.mrb[0].mxu0
        %v509 = vpop.f32.mrb[0].mxu0
        %v510 = vadd.f32 %v359, %v509
        %v511 = vpop.f32.mrb[0].mxu0
        %512 = vmatprep.mubr.bf16.mxu0 0
        %513 = vmatmul.mubr.bf16.gmra.mrb[0].mxu0 %v315
        %v514 = vpop.f32.mrb[0].mxu0
        %v515 = vadd.f32 %v359, %v514
        %v516 = vpop.f32.mrb[0].mxu0
        %v517 = vpop.f32.mrb[0].mxu0
        %v518 = vadd.f32 %v359, %v517
        %v519 = vpop.f32.mrb[0].mxu0
        %520 = vmatprep.mubr.bf16.mxu0 0
        %521 = vmatmul.mubr.bf16.gmra.mrb[0].mxu0 %v316
        %v522 = vpop.f32.mrb[0].mxu0
        %v523 = vadd.f32 %v359, %v522
        %v524 = vpop.f32.mrb[0].mxu0
        %v525 = vpop.f32.mrb[0].mxu0
        %v526 = vadd.f32 %v359, %v525
        %v527 = vpop.f32.mrb[0].mxu0
        %528 = vmatprep.mubr.bf16.mxu0 0
        %529 = vmatmul.mubr.bf16.gmra.mrb[0].mxu0 %v317
        %v530 = vpop.f32.mrb[0].mxu0
        %v531 = vadd.f32 %v359, %v530
        %v532 = vpop.f32.mrb[0].mxu0
        %v533 = vpop.f32.mrb[0].mxu0
        %v534 = vadd.f32 %v359, %v533
        %v535 = vpop.f32.mrb[0].mxu0
        %536 = vmatprep.mubr.bf16.mxu0 0
        %537 = vmatmul.mubr.bf16.gmra.mrb[0].mxu0 %v318
        %v538 = vpop.f32.mrb[0].mxu0
        %v539 = vadd.f32 %v359, %v538
        %v540 = vpop.f32.mrb[0].mxu0
        %v541 = vpop.f32.mrb[0].mxu0
        %v542 = vadd.f32 %v359, %v541
        %v543 = vpop.f32.mrb[0].mxu0
        %544 = vmatprep.mubr.bf16.mxu0 0
        %545 = vmatmul.mubr.bf16.gmra.mrb[0].mxu0 %v319
        %v546 = vpop.f32.mrb[0].mxu0
        %v547 = vadd.f32 %v359, %v546
        %v548 = vpop.f32.mrb[0].mxu0
        %v549 = vpop.f32.mrb[0].mxu0
        %v550 = vadd.f32 %v359, %v549
        %v551 = vpop.f32.mrb[0].mxu0
        %552 = vmatprep.mubr.bf16.mxu0 0
        %553 = vmatmul.mubr.bf16.gmra.mrb[0].mxu0 %v320
        %v554 = vpop.f32.mrb[0].mxu0
        %v555 = vadd.f32 %v359, %v554
        %v556 = vpop.f32.mrb[0].mxu0
        %v557 = vpop.f32.mrb[0].mxu0
        %v558 = vadd.f32 %v359, %v557
        %v559 = vpop.f32.mrb[0].mxu0
        %560 = vmatprep.mubr.bf16.mxu0 0
        %561 = vmatmul.mubr.bf16.gmra.mrb[0].mxu0 %v321
        %v562 = vpop.f32.mrb[0].mxu0
        %v563 = vadd.f32 %v359, %v562
        %v564 = vpop.f32.mrb[0].mxu0
        %v565 = vpop.f32.mrb[0].mxu0
        %v566 = vadd.f32 %v359, %v565
        %v567 = vpop.f32.mrb[0].mxu0
        %568 = vmatprep.mubr.bf16.mxu0 0
        %569 = vmatmul.mubr.bf16.gmra.mrb[0].mxu0 %v322
        %v570 = vpop.f32.mrb[0].mxu0
        %v571 = vadd.f32 %v359, %v570
        %v572 = vpop.f32.mrb[0].mxu0
        %v573 = vpop.f32.mrb[0].mxu0
        %v574 = vadd.f32 %v359, %v573
        %v575 = vpop.f32.mrb[0].mxu0
        %576 = vmatprep.mubr.bf16.mxu0 0
        %577 = vmatmul.mubr.bf16.gmra.mrb[0].mxu0 %v323
        %v578 = vpop.f32.mrb[0].mxu0
        %v579 = vadd.f32 %v359, %v578
        %v580 = vpop.f32.mrb[0].mxu0
        %v581 = vpop.f32.mrb[0].mxu0
        %v582 = vadd.f32 %v359, %v581
        %v583 = vpop.f32.mrb[0].mxu0
        %584 = vmatprep.mubr.bf16.mxu0 0
        %585 = vmatmul.mubr.bf16.gmra.mrb[0].mxu0 %v324
        %v586 = vpop.f32.mrb[0].mxu0
        %v587 = vadd.f32 %v359, %v586
        %v588 = vpop.f32.mrb[0].mxu0
        %v589 = vpop.f32.mrb[0].mxu0
        %v590 = vadd.f32 %v359, %v589
        %v591 = vpop.f32.mrb[0].mxu0
        %592 = vmatprep.mubr.bf16.mxu0 0
        %593 = vmatmul.mubr.bf16.gmra.mrb[0].mxu0 %v325
        %v594 = vpop.f32.mrb[0].mxu0
        %v595 = vadd.f32 %v359, %v594
        %v596 = vpop.f32.mrb[0].mxu0
        %v597 = vpop.f32.mrb[0].mxu0
        %v598 = vadd.f32 %v359, %v597
        %v599 = vpop.f32.mrb[0].mxu0
        %600 = vmatprep.mubr.bf16.mxu0 0
        %601 = vmatmul.mubr.bf16.gmra.mrb[0].mxu0 %v326
        %v602 = vpop.f32.mrb[0].mxu0
        %v603 = vadd.f32 %v359, %v602
        %v604 = vpop.f32.mrb[0].mxu0
        %v605 = vpop.f32.mrb[0].mxu0
        %v606 = vadd.f32 %v359, %v605
        %v607 = vpop.f32.mrb[0].mxu0
        %608 = vmatprep.mubr.bf16.mxu0 0
        %609 = vmatmul.mubr.bf16.gmra.mrb[0].mxu0 %v327
        %v610 = vpop.f32.mrb[0].mxu0
        %v611 = vadd.f32 %v359, %v610
        %v612 = vpop.f32.mrb[0].mxu0
        %v613 = vpop.f32.mrb[0].mxu0
        %v614 = vadd.f32 %v359, %v613
        %v615 = vpop.f32.mrb[0].mxu0
        %616 = vmatprep.mubr.bf16.mxu0 0
        %617 = vmatmul.mubr.bf16.gmra.mrb[0].mxu0 %v328
        %v618 = vpop.f32.mrb[0].mxu0
        %v619 = vadd.f32 %v359, %v618
        %v620 = vpop.f32.mrb[0].mxu0
        %v621 = vpop.f32.mrb[0].mxu0
        %v622 = vadd.f32 %v359, %v621
        %v623 = vpop.f32.mrb[0].mxu0
        %624 = vmatprep.mubr.bf16.mxu0 0
        %625 = vmatmul.mubr.bf16.gmra.mrb[0].mxu0 %v329
        %v626 = vpop.f32.mrb[0].mxu0
        %v627 = vadd.f32 %v359, %v626
        %v628 = vpop.f32.mrb[0].mxu0
        %v629 = vpop.f32.mrb[0].mxu0
        %v630 = vadd.f32 %v359, %v629
        %v631 = vpop.f32.mrb[0].mxu0
        %632 = vmatprep.mubr.bf16.mxu0 0
        %633 = vmatmul.mubr.bf16.gmra.mrb[0].mxu0 %v330
        %v634 = vpop.f32.mrb[0].mxu0
        %v635 = vadd.f32 %v359, %v634
        %v636 = vpop.f32.mrb[0].mxu0
        %v637 = vpop.f32.mrb[0].mxu0
        %v638 = vadd.f32 %v359, %v637
        %v639 = vpop.f32.mrb[0].mxu0
        %640 = vmatprep.mubr.bf16.mxu0 0
        %641 = vmatmul.mubr.bf16.gmra.mrb[0].mxu0 %v331
        %v642 = vpop.f32.mrb[0].mxu0
        %v643 = vadd.f32 %v359, %v642
        %v644 = vpop.f32.mrb[0].mxu0
        %v645 = vpop.f32.mrb[0].mxu0
        %v646 = vadd.f32 %v359, %v645
        %v647 = vpop.f32.mrb[0].mxu0
        %648 = vmatprep.mubr.bf16.mxu0 0
        %649 = vmatmul.mubr.bf16.gmra.mrb[0].mxu0 %v332
        %v650 = vpop.f32.mrb[0].mxu0
        %v651 = vadd.f32 %v359, %v650
        %v652 = vpop.f32.mrb[0].mxu0
        %v653 = vpop.f32.mrb[0].mxu0
        %v654 = vadd.f32 %v359, %v653
        %v655 = vpop.f32.mrb[0].mxu0
        %656 = vmatprep.mubr.bf16.mxu0 0
        %657 = vmatmul.mubr.bf16.gmra.mrb[0].mxu0 %v333
        %v658 = vpop.f32.mrb[0].mxu0
        %v659 = vadd.f32 %v359, %v658
        %v660 = vpop.f32.mrb[0].mxu0
        %v661 = vpop.f32.mrb[0].mxu0
        %v662 = vadd.f32 %v359, %v661
        %v663 = vpop.f32.mrb[0].mxu0
        %664 = vmatprep.mubr.bf16.mxu0 0
        %665 = vmatmul.mubr.bf16.gmra.mrb[0].mxu0 %v334
        %v666 = vpop.f32.mrb[0].mxu0
        %v667 = vadd.f32 %v359, %v666
        %v668 = vpop.f32.mrb[0].mxu0
        %v669 = vpop.f32.mrb[0].mxu0
        %v670 = vadd.f32 %v359, %v669
        %v671 = vpop.f32.mrb[0].mxu0
        %672 = vmatprep.mubr.bf16.mxu0 0
        %673 = vmatmul.mubr.bf16.gmra.mrb[0].mxu0 %v335
        %v674 = vpop.f32.mrb[0].mxu0
        %v675 = vadd.f32 %v359, %v674
        %v676 = vpop.f32.mrb[0].mxu0
        %v677 = vpop.f32.mrb[0].mxu0
        %v678 = vadd.f32 %v359, %v677
        %v679 = vpop.f32.mrb[0].mxu0
        %680 = vmatprep.mubr.bf16.mxu0 0
        %681 = vmatmul.mubr.bf16.gmra.mrb[0].mxu0 %v336
        %v682 = vpop.f32.mrb[0].mxu0
        %v683 = vadd.f32 %v359, %v682
        %v684 = vpop.f32.mrb[0].mxu0
        %v685 = vpop.f32.mrb[0].mxu0
        %v686 = vadd.f32 %v359, %v685
        %v687 = vpop.f32.mrb[0].mxu0
        %688 = vmatprep.mubr.bf16.mxu0 0
        %689 = vmatmul.mubr.bf16.gmra.mrb[0].mxu0 %v337
        %v690 = vpop.f32.mrb[0].mxu0
        %v691 = vadd.f32 %v359, %v690
        %v692 = vpop.f32.mrb[0].mxu0
        %v693 = vpop.f32.mrb[0].mxu0
        %v694 = vadd.f32 %v359, %v693
        %v695 = vpop.f32.mrb[0].mxu0
        %696 = vdwg.mxu0
        %697 = vst [vmem:[%s235] sm:$0xff] %v443
        %698 = vst [vmem:[%s235 + $0x8] sm:$0xff] %v446
        %699 = vst [vmem:[%s235 + $0x10] sm:$0xff] %v451
        %700 = vst [vmem:[%s235 + $0x18] sm:$0xff] %v454
        %701 = vst [vmem:[%s235 + $0x20] sm:$0xff] %v459
        %702 = vst [vmem:[%s235 + $0x28] sm:$0xff] %v462
        %703 = vst [vmem:[%s235 + $0x30] sm:$0xff] %v467
        %704 = vst [vmem:[%s235 + $0x38] sm:$0xff] %v470
        %705 = vst [vmem:[%s235 + $0x40] sm:$0xff] %v475
        %706 = vst [vmem:[%s235 + $0x48] sm:$0xff] %v478
        %707 = vst [vmem:[%s235 + $0x50] sm:$0xff] %v483
        %708 = vst [vmem:[%s235 + $0x58] sm:$0xff] %v486
        %709 = vst [vmem:[%s235 + $0x60] sm:$0xff] %v491
        %710 = vst [vmem:[%s235 + $0x68] sm:$0xff] %v494
        %711 = vst [vmem:[%s235 + $0x70] sm:$0xff] %v499
        %712 = vst [vmem:[%s235 + $0x78] sm:$0xff] %v502
        %713 = vst [vmem:[%s235 + $0x80] sm:$0xff] %v507
        %714 = vst [vmem:[%s235 + $0x88] sm:$0xff] %v510
        %715 = vst [vmem:[%s235 + $0x90] sm:$0xff] %v515
        %716 = vst [vmem:[%s235 + $0x98] sm:$0xff] %v518
        %717 = vst [vmem:[%s235 + $0xa0] sm:$0xff] %v523
        %718 = vst [vmem:[%s235 + $0xa8] sm:$0xff] %v526
        %719 = vst [vmem:[%s235 + $0xb0] sm:$0xff] %v531
        %720 = vst [vmem:[%s235 + $0xb8] sm:$0xff] %v534
        %721 = vst [vmem:[%s235 + $0xc0] sm:$0xff] %v539
        %722 = vst [vmem:[%s235 + $0xc8] sm:$0xff] %v542
        %723 = vst [vmem:[%s235 + $0xd0] sm:$0xff] %v547
        %724 = vst [vmem:[%s235 + $0xd8] sm:$0xff] %v550
        %725 = vst [vmem:[%s235 + $0xe0] sm:$0xff] %v555
        %726 = vst [vmem:[%s235 + $0xe8] sm:$0xff] %v558
        %727 = vst [vmem:[%s235 + $0xf0] sm:$0xff] %v563
        %728 = vst [vmem:[%s235 + $0xf8] sm:$0xff] %v566
        %729 = vst [vmem:[%s235 + $0x100] sm:$0xff] %v571
        %730 = vst [vmem:[%s235 + $0x108] sm:$0xff] %v574
        %731 = vst [vmem:[%s235 + $0x110] sm:$0xff] %v579
        %732 = vst [vmem:[%s235 + $0x118] sm:$0xff] %v582
        %733 = vst [vmem:[%s235 + $0x120] sm:$0xff] %v587
        %734 = vst [vmem:[%s235 + $0x128] sm:$0xff] %v590
        %735 = vst [vmem:[%s235 + $0x130] sm:$0xff] %v595
        %736 = vst [vmem:[%s235 + $0x138] sm:$0xff] %v598
        %737 = vst [vmem:[%s235 + $0x140] sm:$0xff] %v603
        %738 = vst [vmem:[%s235 + $0x148] sm:$0xff] %v606
        %739 = vst [vmem:[%s235 + $0x150] sm:$0xff] %v611
        %740 = vst [vmem:[%s235 + $0x158] sm:$0xff] %v614
        %741 = vst [vmem:[%s235 + $0x160] sm:$0xff] %v619
        %742 = vst [vmem:[%s235 + $0x168] sm:$0xff] %v622
        %743 = vst [vmem:[%s235 + $0x170] sm:$0xff] %v627
        %744 = vst [vmem:[%s235 + $0x178] sm:$0xff] %v630
        %745 = vst [vmem:[%s235 + $0x180] sm:$0xff] %v635
        %746 = vst [vmem:[%s235 + $0x188] sm:$0xff] %v638
        %747 = vst [vmem:[%s235 + $0x190] sm:$0xff] %v643
        %748 = vst [vmem:[%s235 + $0x198] sm:$0xff] %v646
        %749 = vst [vmem:[%s235 + $0x1a0] sm:$0xff] %v651
        %750 = vst [vmem:[%s235 + $0x1a8] sm:$0xff] %v654
        %751 = vst [vmem:[%s235 + $0x1b0] sm:$0xff] %v659
        %752 = vst [vmem:[%s235 + $0x1b8] sm:$0xff] %v662
        %753 = vst [vmem:[%s235 + $0x1c0] sm:$0xff] %v667
        %754 = vst [vmem:[%s235 + $0x1c8] sm:$0xff] %v670
        %755 = vst [vmem:[%s235 + $0x1d0] sm:$0xff] %v675
        %756 = vst [vmem:[%s235 + $0x1d8] sm:$0xff] %v678
        %757 = vst [vmem:[%s235 + $0x1e0] sm:$0xff] %v683
        %758 = vst [vmem:[%s235 + $0x1e8] sm:$0xff] %v686
        %759 = vst [vmem:[%s235 + $0x1f0] sm:$0xff] %v691
        %760 = vst [vmem:[%s235 + $0x1f8] sm:$0xff] %v694
        %s761 = sand.u32 %s121, 1
        %s762 = scalar_lea.sflag [#allocation4], %s761
        %s763 = sand.u32 %s121, 1
        %s764 = smul.addr %s763, 512
        %s765 = scalar_lea.vmem [#allocation7], %s764
        // Predicated region
        $region41: #{tpu_custom_call.1} parent=31 // pred_check
          %p766 = pneg %p131
        $region42: #{tpu_custom_call.1} parent=31 // pred_check_branch
          %768 = sbr.rel (%p766) target = $region44
        $region43: #{tpu_custom_call.1} parent=31 // pred_region
          %s769 = smul.u32 64, %s25
          %s771 = ssub.s32 8192, 8192
          %772 = vsyncadd %s762, %s771
          %s773 = sadd.s32 %s26, %s769
          %s774 = smul.addr %s773, 128
          %s775 = scalar_lea.hbm %s3, %s774
          %s776 = sshll.u32 %s765, 4
          %s777 = int_to_ptr.vmem [resolvable:$true] %s776
          %782 = dma.vmem_to_hbm [thread:$0]  %s777, 8192, %s775, %s762, 128, 128, 8
        $region44: #{tpu_custom_call.1} parent=31 // pred_fallthru
          _
      $region32: #{tpu_custom_call.1} parent=5 // pred_fallthru
        _
      %p783 = scmp.le.s32.totalorder 2, %s16
      // Predicated region
      $region45: #{tpu_custom_call.1} parent=5 // pred_check
        %p784 = pneg %p783
      $region46: #{tpu_custom_call.1} parent=5 // pred_check_branch
        %786 = sbr.rel (%p784) target = $region48
      $region47: #{tpu_custom_call.1} parent=5 // pred_region
        %s787 = ssub.s32 %s16, 2
        // Predicated region
        $region49: #{tpu_custom_call.1} parent=47 // pred_check
          %p788 = pneg %p137
        $region50: #{tpu_custom_call.1} parent=47 // pred_check_branch
          %790 = sbr.rel (%p788) target = $region52
        $region51: #{tpu_custom_call.1} parent=47 // pred_region
          %s791 = sand.u32 %s122, 1
          %s792 = scalar_lea.sflag [#allocation4], %s791
          %s793 = sand.u32 %s122, 1
          %s794 = smul.addr %s793, 512
          %s795 = scalar_lea.vmem [#allocation7], %s794
          %796 = dma.done %s792, 8192
        $region52: #{tpu_custom_call.1} parent=47 // pred_fallthru
          _
      $region48: #{tpu_custom_call.1} parent=5 // pred_fallthru
        _
    $region6: #{tpu_custom_call.1} parent=1 // loop_footer
      %s20 = sadd.s32 1, %s16
    $region7: #{tpu_custom_call.1} parent=1 // loop_footer_branch
      %15 = sbr.rel target = $region3
    $region8: #{tpu_custom_call.1} parent=1 // loop_exit
      _
    %797 = vsyncpa [#allocation3], 1
    %s798 = scalar_lea.sflag [#allocation3], 1
    %799 = vsyncpa %s798, 1
    %800 = vsyncpa [#allocation6], 1
    %801 = vsyncpa [#allocation4], 1
    %s802 = scalar_lea.sflag [#allocation4], 1
    %803 = vsyncpa %s802, 1

</llo_original>
